<compile_context>
chip_gen: v7x
topology: tpu7x:2x2x1
jax: 0.10.0
libtpu: 0.0.40
codegen_flags: <defaults>
</compile_context>

<pallas_src>
import functools

import jax
import jax.numpy as jnp
from jax.experimental import pallas as pl
from jax.experimental.pallas import tpu as pltpu


def _group_norm_kernel(x_ref, w_ref, b_ref, o_ref, *, eps, num_groups, inv_count):
    # x_ref: (1, cg, HW) slab for one (batch, group).
    # w_ref / b_ref: (G, cg, 1), resident across all grid steps.
    g = jax.lax.rem(pl.program_id(0), num_groups)

    x = x_ref[...].astype(jnp.float32)                 # (1, cg, HW)

    # Fused single-pass statistics (biased variance, matching unbiased=False).
    s = jnp.sum(x)
    sq = jnp.sum(x * x)
    mean = s * inv_count
    var = jnp.maximum(sq * inv_count - mean * mean, 0.0)
    inv_std = jax.lax.rsqrt(var + eps)                 # EUP slot -> ~free

    w = w_ref[pl.ds(g, 1)].astype(jnp.float32)         # (1, cg, 1)
    b = b_ref[pl.ds(g, 1)].astype(jnp.float32)         # (1, cg, 1)

    # out = (x - mean) * inv_std * w + b  ==  x * scale + shift
    scale = w * inv_std                                # (1, cg, 1)
    shift = b - mean * scale                           # (1, cg, 1)
    o_ref[...] = (x * scale + shift).astype(o_ref.dtype)


def group_normalization(x, weight, bias, *, num_groups, eps=1e-5):
    """GroupNorm forward: x (N, C, H, W), weight/bias (1, C, 1, 1)."""
    N, C, H, W = x.shape
    assert C % num_groups == 0, "num_channels must be divisible by num_groups"
    cg = C // num_groups
    hw = H * W

    # Free views: lane-dense data layout and per-group parameter layout.
    x2 = x.reshape(N * num_groups, cg, hw)
    w2 = weight.reshape(num_groups, cg, 1)
    b2 = bias.reshape(num_groups, cg, 1)

    kernel = functools.partial(
        _group_norm_kernel,
        eps=float(eps),
        num_groups=num_groups,
        inv_count=1.0 / float(cg * hw),
    )

    grid = (N * num_groups,)
    x_spec = pl.BlockSpec((1, cg, hw), lambda i: (i, 0, 0))
    wb_spec = pl.BlockSpec((num_groups, cg, 1), lambda i: (0, 0, 0))  # resident
    out_spec = pl.BlockSpec((1, cg, hw), lambda i: (i, 0, 0))

    # Explicit VMEM budget: 2x double-buffered input + 2x output slab,
    # f32 temporaries, resident params, plus headroom.
    itemsize = jnp.dtype(x.dtype).itemsize
    slab = cg * hw * itemsize
    f32_slab = cg * hw * 4
    needed = 2 * slab + 2 * slab + 2 * f32_slab + 2 * num_groups * cg * 4 + (2 << 20)
    vmem_limit = int(min(max(needed, 16 << 20), 96 << 20))
    # TODO(synk): for very large groups (slab * ~5 > ~1/3 of 64 MiB) add a
    # spatially-tiled two-pass path so the kernel still pipelines on v7x.

    out = pl.pallas_call(
        kernel,
        out_shape=jax.ShapeDtypeStruct((N * num_groups, cg, hw), x.dtype),
        grid_spec=pltpu.PrefetchScalarGridSpec(
            num_scalar_prefetch=0,
            grid=grid,
            in_specs=[x_spec, wb_spec, wb_spec],
            out_specs=out_spec,
        ),
        compiler_params=pltpu.CompilerParams(
            dimension_semantics=("parallel",),
            vmem_limit_bytes=vmem_limit,
        ),
    )(x2, w2, b2)

    return out.reshape(N, C, H, W)


def _reference(x, weight, bias, *, num_groups, eps=1e-5):
    N, C, H, W = x.shape
    xr = x.reshape(N, num_groups, -1)
    mean = xr.mean(-1, keepdims=True)
    var = ((xr - mean) ** 2).mean(-1, keepdims=True)
    xn = (xr - mean) / jnp.sqrt(var + eps)
    xn = xn.reshape(N, C, H, W)
    return xn * weight + bias


if __name__ == "__main__":
    # Small shapes consistent with the module: N=2, C=8, H=W=16, groups=4.
    N, C, H, W = 2, 8, 16, 16
    num_groups = 4
    eps = 1e-5

    key = jax.random.PRNGKey(0)
    kx, kw, kb = jax.random.split(key, 3)
    x = jax.random.normal(kx, (N, C, H, W), dtype=jnp.float32)
    # Module __init__ uses ones/zeros; use deterministic non-trivial values to
    # exercise the affine path (shapes match nn.Parameter(1, C, 1, 1)).
    weight = 1.0 + 0.1 * jax.random.normal(kw, (1, C, 1, 1), dtype=jnp.float32)
    bias = 0.1 * jax.random.normal(kb, (1, C, 1, 1), dtype=jnp.float32)

    out = group_normalization(x, weight, bias, num_groups=num_groups, eps=eps)
    out = jax.block_until_ready(out)

    ref = _reference(x, weight, bias, num_groups=num_groups, eps=eps)
    assert out.shape == (N, C, H, W)
    assert jnp.max(jnp.abs(out - ref)) < 1e-4

    print("KERNEL_OK")
</pallas_src>

<mosaic_0001>
module attributes {stable_mosaic.version = 11 : i64} {
  func.func @_group_norm_kernel(%arg0: i32, %arg1: memref<1x2x256xf32, #tpu.memory_space<vmem>>, %arg2: memref<4x2x1xf32, #tpu.memory_space<vmem>>, %arg3: memref<4x2x1xf32, #tpu.memory_space<vmem>>, %arg4: memref<1x2x256xf32, #tpu.memory_space<vmem>>) attributes {dimension_semantics = [#tpu.dimension_semantics<parallel>], iteration_bounds = array<i64: 8>, scalar_prefetch = 0 : i64, scratch_operands = 0 : i64, tpu.core_type = #tpu.core_type<tc>, window_params = [{transform_indices = @transform_0, window_bounds = array<i64: 1, 2, 256>}, {pipeline_mode = #tpu.pipeline_mode<synchronous>, transform_indices = @transform_1, window_bounds = array<i64: 4, 2, 1>}, {pipeline_mode = #tpu.pipeline_mode<synchronous>, transform_indices = @transform_2, window_bounds = array<i64: 4, 2, 1>}, {transform_indices = @transform_3, window_bounds = array<i64: 1, 2, 256>}]} {
    %c4_i32 = arith.constant 4 : i32
    %0 = arith.remsi %arg0, %c4_i32 : i32
    %c0 = arith.constant 0 : index
    %c0_0 = arith.constant 0 : index
    %c0_1 = arith.constant 0 : index
    %1 = vector.load %arg1[%c0, %c0_0, %c0_1] : memref<1x2x256xf32, #tpu.memory_space<vmem>>, vector<1x2x256xf32>
    %2 = vector.shape_cast %1 : vector<1x2x256xf32> to vector<1x1x2x256xf32>
    %cst = arith.constant dense<0.000000e+00> : vector<1xf32>
    %3 = vector.multi_reduction <add>, %2, %cst [1, 2, 3] : vector<1x1x2x256xf32> to vector<1xf32>
    %4 = vector.shape_cast %3 : vector<1xf32> to vector<1x1x1x1xf32>
    %5 = vector.extract %4[0, 0, 0, 0] : f32 from vector<1x1x1x1xf32>
    %6 = arith.mulf %1, %1 : vector<1x2x256xf32>
    %7 = vector.shape_cast %6 : vector<1x2x256xf32> to vector<1x1x2x256xf32>
    %cst_2 = arith.constant dense<0.000000e+00> : vector<1xf32>
    %8 = vector.multi_reduction <add>, %7, %cst_2 [1, 2, 3] : vector<1x1x2x256xf32> to vector<1xf32>
    %9 = vector.shape_cast %8 : vector<1xf32> to vector<1x1x1x1xf32>
    %10 = vector.extract %9[0, 0, 0, 0] : f32 from vector<1x1x1x1xf32>
    %cst_3 = arith.constant 0.001953125 : f32
    %11 = arith.mulf %5, %cst_3 : f32
    %cst_4 = arith.constant 0.001953125 : f32
    %12 = arith.mulf %10, %cst_4 : f32
    %13 = arith.mulf %11, %11 : f32
    %14 = arith.subf %12, %13 : f32
    %cst_5 = arith.constant 0.000000e+00 : f32
    %15 = arith.maximumf %14, %cst_5 : f32
    %cst_6 = arith.constant 9.99999974E-6 : f32
    %16 = arith.addf %15, %cst_6 : f32
    %17 = math.rsqrt %16 : f32
    %18 = arith.index_cast %0 : i32 to index
    %c0_7 = arith.constant 0 : index
    %c0_8 = arith.constant 0 : index
    %19 = vector.load %arg2[%18, %c0_7, %c0_8] : memref<4x2x1xf32, #tpu.memory_space<vmem>>, vector<1x2x1xf32>
    %20 = arith.index_cast %0 : i32 to index
    %c0_9 = arith.constant 0 : index
    %c0_10 = arith.constant 0 : index
    %21 = vector.load %arg3[%20, %c0_9, %c0_10] : memref<4x2x1xf32, #tpu.memory_space<vmem>>, vector<1x2x1xf32>
    %22 = vector.broadcast %17 : f32 to vector<1x2x1xf32>
    %23 = arith.mulf %19, %22 : vector<1x2x1xf32>
    %24 = vector.broadcast %11 : f32 to vector<1x2x1xf32>
    %25 = arith.mulf %24, %23 : vector<1x2x1xf32>
    %26 = arith.subf %21, %25 : vector<1x2x1xf32>
    %27 = vector.broadcast %23 : vector<1x2x1xf32> to vector<1x2x256xf32>
    %28 = arith.mulf %1, %27 : vector<1x2x256xf32>
    %29 = vector.broadcast %26 : vector<1x2x1xf32> to vector<1x2x256xf32>
    %30 = arith.addf %28, %29 : vector<1x2x256xf32>
    %c0_11 = arith.constant 0 : index
    %c0_12 = arith.constant 0 : index
    %c0_13 = arith.constant 0 : index
    %31 = vector.load %arg4[%c0_11, %c0_12, %c0_13] : memref<1x2x256xf32, #tpu.memory_space<vmem>>, vector<1x2x256xf32>
    tpu.vector_store %arg4[%c0_11, %c0_12, %c0_13], %30 {strides = array<i32>} : memref<1x2x256xf32, #tpu.memory_space<vmem>>, vector<1x2x256xf32>,
    return
  }
  func.func @transform_0(%arg0: i32) -> (i32, i32, i32) {
    %c0_i32 = arith.constant 0 : i32
    %c0_i32_0 = arith.constant 0 : i32
    %c0_i32_1 = arith.constant 0 : i32
    return %arg0, %c0_i32, %c0_i32_0 : i32, i32, i32
  }
  func.func @transform_1(%arg0: i32) -> (i32, i32, i32) {
    %c0_i32 = arith.constant 0 : i32
    %c0_i32_0 = arith.constant 0 : i32
    %c0_i32_1 = arith.constant 0 : i32
    %c0_i32_2 = arith.constant 0 : i32
    return %c0_i32, %c0_i32_0, %c0_i32_1 : i32, i32, i32
  }
  func.func @transform_2(%arg0: i32) -> (i32, i32, i32) {
    %c0_i32 = arith.constant 0 : i32
    %c0_i32_0 = arith.constant 0 : i32
    %c0_i32_1 = arith.constant 0 : i32
    %c0_i32_2 = arith.constant 0 : i32
    return %c0_i32, %c0_i32_0, %c0_i32_1 : i32, i32, i32
  }
  func.func @transform_3(%arg0: i32) -> (i32, i32, i32) {
    %c0_i32 = arith.constant 0 : i32
    %c0_i32_0 = arith.constant 0 : i32
    %c0_i32_1 = arith.constant 0 : i32
    return %arg0, %c0_i32, %c0_i32_0 : i32, i32, i32
  }
}

</mosaic_0001>

<llo_original>
// kernel: tpu_custom_call.1
$region0: #{tpu_custom_call.1}
  #allocation0 [shape = 'u32[]', space=smem, size = 0x4, offset = 0x4, fixed_abs, tag = 'smem constant byte address 0x4 - core index']
  #allocation1 [shape = 'u32[144,128]{1,0:T(1,128)}', space=vmem, size = 0x12000, scoped, tag = 'internal scratch']
  %s0 = inlined_call_operand.hbm [shape: f32[8,2,256], index: 0, kind: input, shape index: {}]
  %s1 = inlined_call_operand.vmem [shape: f32[4,2,1], index: 1, kind: input, shape index: {}]
  %s2 = inlined_call_operand.vmem [shape: f32[4,2,1], index: 2, kind: input, shape index: {}]
  %s3 = inlined_call_operand.hbm [shape: f32[8,2,256], index: 3, kind: output, shape index: {}]
  %s4 = sld [smem:[#allocation0]]
  $region49: #{tpu_custom_call.1} parent=0
    _
  %s6 = ssub.s32 1, %s4
  %s7 = scalar_select 0, %s6, %s4
  $region1: #{tpu_custom_call.1} parent=0
    #allocation2 [shape = 'u8[4096]{0}', space=vmem, size = 0x1000, scoped, tag = 'input window, operand 0']
    #allocation3 [shape = 's32[2]{0}', space=sflag, size = 0x8, scoped, tag = 'scoped memory for tpu_custom_call.1']
    #allocation4 [shape = 's32[2]{0}', space=sflag, size = 0x8, scoped, tag = 'scoped memory for tpu_custom_call.1']
    #allocation5 [shape = 'u8[4096]{0}', space=vmem, size = 0x1000, scoped, tag = 'output window, operand 0']
    %8 = vsyncpa [#allocation3], 0
    %s9 = scalar_lea.sflag [#allocation3], 1
    %10 = vsyncpa %s9, 0
    %11 = vsyncpa [#allocation4], 0
    %s12 = scalar_lea.sflag [#allocation4], 1
    %13 = vsyncpa %s12, 0
    loop: start=0, step=1, limit=10
    $region2: #{tpu_custom_call.1} parent=1 // loop_pre_header
      _
    $region3: #{tpu_custom_call.1} parent=1 // loop_header
      %s15 = sphi 0, %s19
      %p16 = scmp.ge.s32.totalorder %s15, 10
      %s25 = sphi 0, %s27
      %s28 = sphi 0, %s25
      %s29 = sphi 0, %s28
      %s45 = sphi 0, %s29
      %s49 = sphi 0, %s49
      %s51 = sphi 0, %s49
      %s52 = sphi 0, %s51
      %s66 = sphi 0, %s52
      %s70 = sphi 0, %s70
      %s72 = sphi 0, %s70
      %s73 = sphi 0, %s72
      %s87 = sphi 0, %s73
      %s93 = sphi 0, %s95
      %s96 = sphi 0, %s93
      %s97 = sphi 0, %s96
      %s113 = sphi 0, %s97
    $region4: #{tpu_custom_call.1} parent=1 // loop_header_branch
      %18 = sbr.rel (%p16) target = $region8
    $region5: #{tpu_custom_call.1} parent=1 // loop_body
      %s20 = ssub.s32 %s15, 1
      %s21 = ssub.s32 %s15, 2
      %s22 = sadd.s32 %s15, 1
      %s23 = ssub.s32 %s15, %s22
      %p24 = scmp.eq.s32.totalorder %s23, 0
      %s26 = sadd.s32 %s25, 1
      %s27 = scalar_select %p24, %s25, %s26
      %p30 = pneg %p24
      %p31 = scmp.eq.s32.totalorder %s15, 7
      %p32 = por %p30, %p31
      %p33 = scmp.ne.s32.totalorder %s25, %s28
      %p34 = scmp.eq.s32.totalorder %s15, 0
      %p35 = por %p33, %p34
      %p36 = scmp.ne.s32.totalorder %s25, %s28
      %p37 = scmp.eq.s32.totalorder %s20, 7
      %p38 = por %p36, %p37
      %p39 = scmp.ne.s32.totalorder %s28, %s29
      %p40 = scmp.eq.s32.totalorder %s20, 0
      %p41 = por %p39, %p40
      %p42 = scmp.ne.s32.totalorder %s28, %s29
      %p43 = scmp.eq.s32.totalorder %s21, 7
      %p44 = por %p42, %p43
      %p46 = scmp.ne.s32.totalorder %s29, %s45
      %p47 = scmp.eq.s32.totalorder %s21, 0
      %p48 = por %p46, %p47
      %s50 = sadd.s32 %s49, 1
      %p53 = scmp.eq.s32.totalorder %s15, 7
      %p54 = scmp.ne.s32.totalorder %s49, %s51
      %p55 = scmp.eq.s32.totalorder %s15, 0
      %p56 = por %p54, %p55
      %p57 = scmp.ne.s32.totalorder %s49, %s51
      %p58 = scmp.eq.s32.totalorder %s20, 7
      %p59 = por %p57, %p58
      %p60 = scmp.ne.s32.totalorder %s51, %s52
      %p61 = scmp.eq.s32.totalorder %s20, 0
      %p62 = por %p60, %p61
      %p63 = scmp.ne.s32.totalorder %s51, %s52
      %p64 = scmp.eq.s32.totalorder %s21, 7
      %p65 = por %p63, %p64
      %p67 = scmp.ne.s32.totalorder %s52, %s66
      %p68 = scmp.eq.s32.totalorder %s21, 0
      %p69 = por %p67, %p68
      %s71 = sadd.s32 %s70, 1
      %p74 = scmp.eq.s32.totalorder %s15, 7
      %p75 = scmp.ne.s32.totalorder %s70, %s72
      %p76 = scmp.eq.s32.totalorder %s15, 0
      %p77 = por %p75, %p76
      %p78 = scmp.ne.s32.totalorder %s70, %s72
      %p79 = scmp.eq.s32.totalorder %s20, 7
      %p80 = por %p78, %p79
      %p81 = scmp.ne.s32.totalorder %s72, %s73
      %p82 = scmp.eq.s32.totalorder %s20, 0
      %p83 = por %p81, %p82
      %p84 = scmp.ne.s32.totalorder %s72, %s73
      %p85 = scmp.eq.s32.totalorder %s21, 7
      %p86 = por %p84, %p85
      %p88 = scmp.ne.s32.totalorder %s73, %s87
      %p89 = scmp.eq.s32.totalorder %s21, 0
      %p90 = por %p88, %p89
      %s91 = ssub.s32 %s15, %s22
      %p92 = scmp.eq.s32.totalorder %s91, 0
      %s94 = sadd.s32 %s93, 1
      %s95 = scalar_select %p92, %s93, %s94
      %p98 = pneg %p92
      %p99 = scmp.eq.s32.totalorder %s15, 7
      %p100 = por %p98, %p99
      %p101 = scmp.ne.s32.totalorder %s93, %s96
      %p102 = scmp.eq.s32.totalorder %s15, 0
      %p103 = por %p101, %p102
      %p104 = scmp.ne.s32.totalorder %s93, %s96
      %p105 = scmp.eq.s32.totalorder %s20, 7
      %p106 = por %p104, %p105
      %p107 = scmp.ne.s32.totalorder %s96, %s97
      %p108 = scmp.eq.s32.totalorder %s20, 0
      %p109 = por %p107, %p108
      %p110 = scmp.ne.s32.totalorder %s96, %s97
      %p111 = scmp.eq.s32.totalorder %s21, 7
      %p112 = por %p110, %p111
      %p114 = scmp.ne.s32.totalorder %s97, %s113
      %p115 = scmp.eq.s32.totalorder %s21, 0
      %p116 = por %p114, %p115
      %p117 = scmp.le.s32.totalorder 1, %s15
      %p118 = scmp.lt.s32.totalorder %s15, 9
      %p119 = pnand %p117, %p118
      %p120 = pneg %p119
      // Predicated region
      $region9: #{tpu_custom_call.1} parent=5 // pred_check
        _
      $region10: #{tpu_custom_call.1} parent=5 // pred_check_branch
        %122 = sbr.rel (%p119) target = $region12
      $region11: #{tpu_custom_call.1} parent=5 // pred_region
        %s123 = ssub.s32 %s15, 1
        // Predicated region
        $region13: #{tpu_custom_call.1} parent=11 // pred_check
          %p124 = pneg %p62
        $region14: #{tpu_custom_call.1} parent=11 // pred_check_branch
          %126 = sbr.rel (%p124) target = $region16
        $region15: #{tpu_custom_call.1} parent=11 // pred_region
          _
        $region16: #{tpu_custom_call.1} parent=11 // pred_fallthru
          _
        // Predicated region
        $region17: #{tpu_custom_call.1} parent=11 // pred_check
          %p127 = pneg %p83
        $region18: #{tpu_custom_call.1} parent=11 // pred_check_branch
          %129 = sbr.rel (%p127) target = $region20
        $region19: #{tpu_custom_call.1} parent=11 // pred_region
          _
        $region20: #{tpu_custom_call.1} parent=11 // pred_fallthru
          _
      $region12: #{tpu_custom_call.1} parent=5 // pred_fallthru
        _
      %p130 = scmp.lt.s32.totalorder %s15, 8
      // Predicated region
      $region21: #{tpu_custom_call.1} parent=5 // pred_check
        %p131 = pneg %p130
      $region22: #{tpu_custom_call.1} parent=5 // pred_check_branch
        %133 = sbr.rel (%p131) target = $region24
      $region23: #{tpu_custom_call.1} parent=5 // pred_region
        // Predicated region
        $region25: #{tpu_custom_call.1} parent=23 // pred_check
          %p134 = pneg %p35
        $region26: #{tpu_custom_call.1} parent=23 // pred_check_branch
          %136 = sbr.rel (%p134) target = $region28
        $region27: #{tpu_custom_call.1} parent=23 // pred_region
          %s137 = sand.u32 %s25, 1
          %s138 = scalar_lea.sflag [#allocation3], %s137
          %s139 = sand.u32 %s25, 1
          %s140 = smul.addr %s139, 4
          %s141 = scalar_lea.vmem [#allocation2], %s140
          %s143 = ssub.s32 64, 64
          %144 = vsyncadd %s138, %s143
          %s145 = smul.addr %s15, 2
          %s146 = smul.addr %s145, 32
          %s147 = scalar_lea.hbm %s0, %s146
          %s149 = sshll.u32 %s141, 4
          %s150 = int_to_ptr.vmem [resolvable:$true] %s149
          %152 = dma.hbm_to_vmem [thread:$0]  %s147, 64, %s150, %s138
        $region28: #{tpu_custom_call.1} parent=23 // pred_fallthru
          _
      $region24: #{tpu_custom_call.1} parent=5 // pred_fallthru
        _
      %p153 = scmp.le.s32.totalorder 1, %s15
      %p154 = scmp.lt.s32.totalorder %s15, 9
      %p155 = pnand %p153, %p154
      %p156 = pneg %p155
      // Predicated region
      $region29: #{tpu_custom_call.1} parent=5 // pred_check
        _
      $region30: #{tpu_custom_call.1} parent=5 // pred_check_branch
        %158 = sbr.rel (%p155) target = $region32
      $region31: #{tpu_custom_call.1} parent=5 // pred_region
        %s159 = ssub.s32 %s15, 1
        %s160 = sand.u32 %s28, 1
        %s161 = scalar_lea.sflag [#allocation3], %s160
        %s162 = sand.u32 %s28, 1
        %s163 = smul.addr %s162, 4
        %s164 = scalar_lea.vmem [#allocation2], %s163
        // Predicated region
        $region33: #{tpu_custom_call.1} parent=31 // pred_check
          %p165 = pneg %p41
        $region34: #{tpu_custom_call.1} parent=31 // pred_check_branch
          %167 = sbr.rel (%p165) target = $region36
        $region35: #{tpu_custom_call.1} parent=31 // pred_region
          %168 = dma.done %s161, 64
        $region36: #{tpu_custom_call.1} parent=31 // pred_fallthru
          _
        %s169 = sand.u32 %s28, 1
        %s170 = scalar_lea.sflag [#allocation3], %s169
        %s171 = sand.u32 %s28, 1
        %s172 = smul.addr %s171, 4
        %s173 = scalar_lea.vmem [#allocation2], %s172
        %p174 = pneg %p41
        %p175 = pneg %p38
        %p176 = pneg %p62
        %p177 = pneg %p59
        %p178 = pneg %p83
        %p179 = pneg %p80
        %p180 = pneg %p109
        %p181 = pneg %p106
        %s182 = sand.u32 %s96, 1
        %s183 = scalar_lea.sflag [#allocation4], %s182
        %s184 = sand.u32 %s96, 1
        %s185 = smul.addr %s184, 4
        %s186 = scalar_lea.vmem [#allocation5], %s185
        %p187 = scmp.lt.s32.totalorder %s20, 0
        %s188 = ssub.s32 0, %s20
        %s189 = scalar_select %p187, %s188, %s20
        %s190 = sand.u32 %s189, 3
        %s191 = ssub.s32 0, %s190
        %s192 = scalar_select %p187, %s191, %s190
        %v193 = vld [vmem:[%s164] sm:$0xf]
        %v196 = vunpack.c.l.s4 1983009808
        %v197 = vunpack.c.0.s8 %v196
        %v198 = vlaneseq
        %v199 = vshrl.u32 %v198, 7
        %v200 = vsub.s32 %v197, %v199
        %v201 = vrot.slane %v193, %v200
        %v202 = vcombine.high %v201, %v201
        %vm205 = vcmask 1041408
        %v206 = vsel %vm205, %v201, 0.0
        %v207 = vsel %vm205, %v202, 0.0
        %v208 = vadd.f32 %v206, %v207
        %209 = vadd.xlane.f32.xlu0 %v208
        %v210 = vpop.xlane.xlu0 %209
        %v211 = vrot.slane %v210, 4
        %v212 = vadd.f32 %v210, %v211
        %v213 = vrot.slane %v212, 2
        %v214 = vadd.f32 %v212, %v213
        %v215 = vrot.slane %v214, 1
        %v216 = vadd.f32 %v214, %v215
        %s217 = vtos %v216
        %v218 = vmul.f32 %v193, %v193
        %v221 = vunpack.c.l.s4 1983009808
        %v222 = vunpack.c.0.s8 %v221
        %v223 = vlaneseq
        %v224 = vshrl.u32 %v223, 7
        %v225 = vsub.s32 %v222, %v224
        %v226 = vrot.slane %v218, %v225
        %v227 = vcombine.high %v226, %v226
        %v230 = vsel %vm205, %v226, 0.0
        %v231 = vsel %vm205, %v227, 0.0
        %v232 = vadd.f32 %v230, %v231
        %233 = vadd.xlane.f32.xlu0 %v232
        %v234 = vpop.xlane.xlu0 %233
        %v235 = vrot.slane %v234, 4
        %v236 = vadd.f32 %v234, %v235
        %v237 = vrot.slane %v236, 2
        %v238 = vadd.f32 %v236, %v237
        %v239 = vrot.slane %v238, 1
        %v240 = vadd.f32 %v238, %v239
        %s241 = vtos %v240
        %s242 = smul.f32 %s217, 0.001953125
        %s243 = smul.f32 %s241, 0.001953125
        %s244 = smul.f32 %s242, %s242
        %s245 = ssub.f32 %s243, %s244
        %s246 = smax.f32 %s245, 0.0
        %s247 = sadd.f32 %s246, 1e-05
        %v248 = vstv %s247
        %v249 = vrsqrt.pop %v248
        %s250 = vtos %v249
        %s251 = smul.u32 %s192, 2
        %s252 = scalar_lea.vmem %s1, %s251
        %v253 = vld [vmem:[%s252] sm:$0x3]
        %s254 = scalar_lea.vmem %s2, %s251
        %v255 = vld [vmem:[%s254] sm:$0x3]
        %v256 = vstv %s250
        %v257 = vmul.f32 %v253, %v256
        %v258 = vstv %s242
        %v259 = vmul.f32 %v258, %v257
        %v260 = vsub.f32 %v255, %v259
        %262 = vset.pattern.permute.xlu0 0
        %263 = vperm.xlu0 %262, %v257
        %v264 = vpop.permute.xlu0 %263
        %v266 = vunpack.c.l.s4 269488144
        %v267 = vunpack.c.0.s8 %v266
        %v268 = vlaneseq
        %v269 = vshrl.u32 %v268, 7
        %v270 = vsub.s32 %v267, %v269
        %v271 = vrot.slane %v264, %v270
        %v273 = vmul.f32 %v193, %v271
        %275 = vset.pattern.permute.xlu0 0
        %276 = vperm.xlu0 %275, %v260
        %v277 = vpop.permute.xlu0 %276
        %v279 = vunpack.c.l.s4 269488144
        %v280 = vunpack.c.0.s8 %v279
        %v281 = vlaneseq
        %v282 = vshrl.u32 %v281, 7
        %v283 = vsub.s32 %v280, %v282
        %v284 = vrot.slane %v277, %v283
        %v286 = vadd.f32 %v273, %v284
        %287 = vst [vmem:[%s186] sm:$0xf] %v286
        %s288 = sand.u32 %s96, 1
        %s289 = scalar_lea.sflag [#allocation4], %s288
        %s290 = sand.u32 %s96, 1
        %s291 = smul.addr %s290, 4
        %s292 = scalar_lea.vmem [#allocation5], %s291
        // Predicated region
        $region37: #{tpu_custom_call.1} parent=31 // pred_check
          %p293 = pneg %p106
        $region38: #{tpu_custom_call.1} parent=31 // pred_check_branch
          %295 = sbr.rel (%p293) target = $region40
        $region39: #{tpu_custom_call.1} parent=31 // pred_region
          %s297 = ssub.s32 64, 64
          %298 = vsyncadd %s289, %s297
          %s299 = smul.addr %s20, 2
          %s300 = smul.addr %s299, 32
          %s301 = scalar_lea.hbm %s3, %s300
          %s303 = sshll.u32 %s292, 4
          %s304 = int_to_ptr.vmem [resolvable:$true] %s303
          %306 = dma.vmem_to_hbm [thread:$0]  %s304, 64, %s301, %s289
        $region40: #{tpu_custom_call.1} parent=31 // pred_fallthru
          _
      $region32: #{tpu_custom_call.1} parent=5 // pred_fallthru
        _
      %p307 = scmp.le.s32.totalorder 2, %s15
      // Predicated region
      $region41: #{tpu_custom_call.1} parent=5 // pred_check
        %p308 = pneg %p307
      $region42: #{tpu_custom_call.1} parent=5 // pred_check_branch
        %310 = sbr.rel (%p308) target = $region44
      $region43: #{tpu_custom_call.1} parent=5 // pred_region
        %s311 = ssub.s32 %s15, 2
        // Predicated region
        $region45: #{tpu_custom_call.1} parent=43 // pred_check
          %p312 = pneg %p112
        $region46: #{tpu_custom_call.1} parent=43 // pred_check_branch
          %314 = sbr.rel (%p312) target = $region48
        $region47: #{tpu_custom_call.1} parent=43 // pred_region
          %s315 = sand.u32 %s97, 1
          %s316 = scalar_lea.sflag [#allocation4], %s315
          %s317 = sand.u32 %s97, 1
          %s318 = smul.addr %s317, 4
          %s319 = scalar_lea.vmem [#allocation5], %s318
          %320 = dma.done %s316, 64
        $region48: #{tpu_custom_call.1} parent=43 // pred_fallthru
          _
      $region44: #{tpu_custom_call.1} parent=5 // pred_fallthru
        _
    $region6: #{tpu_custom_call.1} parent=1 // loop_footer
      %s19 = sadd.s32 1, %s15
    $region7: #{tpu_custom_call.1} parent=1 // loop_footer_branch
      %14 = sbr.rel target = $region3
    $region8: #{tpu_custom_call.1} parent=1 // loop_exit
      _
    %321 = vsyncpa [#allocation3], 1
    %s322 = scalar_lea.sflag [#allocation3], 1
    %323 = vsyncpa %s322, 1
    %324 = vsyncpa [#allocation4], 1
    %s325 = scalar_lea.sflag [#allocation4], 1
    %326 = vsyncpa %s325, 1

</llo_original>
